<compile_context>
chip_gen: v6e
topology: v6e:2x2x1
jax: 0.10.0
libtpu: 0.0.40
codegen_flags: <defaults>
</compile_context>

<pallas_src>
import functools
import math

import jax
import jax.numpy as jnp
from jax.experimental import pallas as pl
from jax.experimental.pallas import tpu as pltpu


# ----------------------------- tiling helpers -----------------------------

def _round_up(x, m):
    return ((x + m - 1) // m) * m


def _pick_tile(dim, target, aligns):
    """Bounded tile <= target.  Returns (tile, padded_dim).

    Full dim when it already fits the target; otherwise the largest aligned tile that divides
    dim (alignment preference order); if nothing divides, the dim is zero-padded to a tile
    multiple (never an unbounded full-dim block that could blow the scoped VMEM limit)."""
    if dim <= target:
        return dim, dim
    for align in aligns:
        t = (target // align) * align
        while t >= align:
            if dim % t == 0:
                return t, dim
            t -= align
    align = aligns[-1]
    t = max(align, (target // align) * align)
    return t, _round_up(dim, t)


# ----------------------------- Tiled linear (x @ W + b) -----------------------------

def _linear_kernel(x_ref, w_ref, b_ref, o_ref, acc_ref):
    k = pl.program_id(2)

    @pl.when(k == 0)
    def _():
        # Bias folded into the accumulator init (hides under the first MXU pass).
        acc_ref[...] = jnp.broadcast_to(b_ref[...], acc_ref.shape)

    acc_ref[...] += jnp.dot(x_ref[...], w_ref[...],
                            preferred_element_type=jnp.float32)

    @pl.when(k == pl.num_programs(2) - 1)
    def _():
        o_ref[...] = acc_ref[...].astype(o_ref.dtype)


def pallas_linear(x2d, w, b, *, out_dtype=jnp.float32, tm=256, tn=256, tk=512):
    """x2d: (M, K), w: (K, N), b: (N,) f32 -> (M, N) in out_dtype (f32 accumulation)."""
    M, K = x2d.shape
    K2, N = w.shape
    assert K == K2 and b.shape == (N,)
    # v6e/v7x MXUs are 2x256x256 -> prefer 256-aligned N tiles (128 fallback);
    # bf16 packs 16 rows per sublane group -> 16-aligned M tiles; K tiles 128-aligned.
    tm_, Mp = _pick_tile(M, tm, (16,))
    tn_, Np = _pick_tile(N, tn, (256, 128))
    tk_, Kp = _pick_tile(K, tk, (128,))
    if (Mp, Kp) != (M, K):
        x2d = jnp.pad(x2d, ((0, Mp - M), (0, Kp - K)))
    if (Kp, Np) != (K, N):
        w = jnp.pad(w, ((0, Kp - K), (0, Np - N)))
    b2d = b.astype(jnp.float32).reshape(1, N)
    if Np != N:
        b2d = jnp.pad(b2d, ((0, 0), (0, Np - N)))

    out = pl.pallas_call(
        _linear_kernel,
        out_shape=jax.ShapeDtypeStruct((Mp, Np), out_dtype),
        grid=(Mp // tm_, Np // tn_, Kp // tk_),
        in_specs=[
            pl.BlockSpec((tm_, tk_), lambda i, j, k: (i, k)),
            pl.BlockSpec((tk_, tn_), lambda i, j, k: (k, j)),
            pl.BlockSpec((1, tn_), lambda i, j, k: (0, j)),
        ],
        out_specs=pl.BlockSpec((tm_, tn_), lambda i, j, k: (i, j)),
        scratch_shapes=[pltpu.VMEM((tm_, tn_), jnp.float32)],
        compiler_params=pltpu.CompilerParams(
            dimension_semantics=("parallel", "parallel", "arbitrary")),
    )(x2d, w, b2d)
    if (Mp, Np) != (M, N):
        out = out[:M, :N]
    return out


# ----------------------------- Multi-head full attention -----------------------------

def _mha_body(q_ref, k_ref, v_ref, o_ref, a_ref, *, n_heads, d_k, d_v, approx_recip):
    # q_ref: (tL, H*d_k), k_ref: (S, H*d_k), v_ref: (S, H*d_v)
    # o_ref: (tL, H*d_v), a_ref: (H, tL, S) or None.
    # The softmax scale is pre-folded into the Q projection weights (no per-element mul here).
    q = q_ref[...]
    k = k_ref[...]
    v = v_ref[...]
    outs = []
    for h in range(n_heads):  # static unroll; heads are lane slices of the packed layout
        qh = q[:, h * d_k:(h + 1) * d_k]                           # (tL, d_k)
        kh = k[:, h * d_k:(h + 1) * d_k]                           # (S,  d_k)
        vh = v[:, h * d_v:(h + 1) * d_v]                           # (S,  d_v)
        # Scores: contract the feature dims directly (no kh.T / XLU transpose).
        s = jax.lax.dot_general(qh, kh, (((1,), (1,)), ((), ())),
                                preferred_element_type=jnp.float32)  # (tL, S) f32
        m = jnp.max(s, axis=-1, keepdims=True)
        p = jnp.exp(s - m)
        denom = jnp.sum(p, axis=-1, keepdims=True)                  # (tL, 1) f32
        if a_ref is not None:
            # Exact reciprocal for the returned attention matrix (rows sum to 1).
            attn = p * pl.reciprocal(denom, approx=False)
            a_ref[h] = attn.astype(a_ref.dtype)                     # lane-dense (tL, S) store
            out_h = jnp.dot(attn.astype(vh.dtype), vh,
                            preferred_element_type=jnp.float32)     # (tL, d_v) f32
        else:
            # Normalize after P@V: scales (tL, d_v) instead of (tL, S).
            out_h = jnp.dot(p.astype(vh.dtype), vh,
                            preferred_element_type=jnp.float32)
            out_h = out_h * pl.reciprocal(denom, approx=approx_recip)
        outs.append(out_h)
    # One lane-dense, full-width output store (no per-head masked partial stores).
    o_ref[...] = jnp.concatenate(outs, axis=-1).astype(o_ref.dtype)


def _mha_kernel_with_attn(q_ref, k_ref, v_ref, o_ref, a_ref, **kw):
    _mha_body(q_ref, k_ref, v_ref, o_ref, a_ref, **kw)


def _mha_kernel_no_attn(q_ref, k_ref, v_ref, o_ref, **kw):
    _mha_body(q_ref, k_ref, v_ref, o_ref, None, **kw)


def pallas_full_attention(q, k, v, *, n_heads, d_k, d_v, output_attention,
                          out_dtype, attn_dtype, approx_recip, l_tile=128):
    """q: (B, L, H*d_k), k: (B, S, H*d_k), v: (B, S, H*d_v).

    grid = (B, L/tL); K/V index maps are constant along the L axis so their blocks stay
    resident across L tiles.  Returns out (B, L, H*d_v) and optionally attn (B, H, L, S)."""
    B, L, HDk = q.shape
    S = k.shape[1]
    HDv = n_heads * d_v

    if L <= l_tile:
        tL, Lp = L, L
    else:
        tL = l_tile                      # multiple of 8 -> legal sublane tiling
        Lp = _round_up(L, tL)
    if Lp != L:
        q = jnp.pad(q, ((0, 0), (0, Lp - L), (0, 0)))

    kern_kwargs = dict(n_heads=n_heads, d_k=d_k, d_v=d_v, approx_recip=approx_recip)
    in_specs = [
        pl.BlockSpec((pl.Squeezed(), tL, HDk), lambda b, l: (b, l, 0)),
        pl.BlockSpec((pl.Squeezed(), S, HDk), lambda b, l: (b, 0, 0)),   # resident across L
        pl.BlockSpec((pl.Squeezed(), S, HDv), lambda b, l: (b, 0, 0)),   # resident across L
    ]
    o_shape = jax.ShapeDtypeStruct((B, Lp, HDv), out_dtype)
    o_spec = pl.BlockSpec((pl.Squeezed(), tL, HDv), lambda b, l: (b, l, 0))

    # Size the scoped-VMEM limit to the real blocks (double-buffered) + in-kernel f32 score
    # temporaries; clamp to [32 MiB, 64 MiB] (<= physical on v5e/v6e/v7x).
    isz = jnp.dtype(q.dtype).itemsize
    blk = (tL * HDk + S * HDk + S * HDv) * isz + tL * HDv * jnp.dtype(out_dtype).itemsize
    if output_attention:
        blk += n_heads * tL * S * jnp.dtype(attn_dtype).itemsize
    est = 2 * blk + 4 * tL * S * 4 + (2 << 20)
    cparams = pltpu.CompilerParams(
        dimension_semantics=("parallel", "parallel"),
        vmem_limit_bytes=int(min(max(est, 32 << 20), 64 << 20)))

    if output_attention:
        out, attn = pl.pallas_call(
            functools.partial(_mha_kernel_with_attn, **kern_kwargs),
            out_shape=(o_shape,
                       jax.ShapeDtypeStruct((B, n_heads, Lp, S), attn_dtype)),
            grid=(B, Lp // tL),
            in_specs=in_specs,
            out_specs=(o_spec,
                       pl.BlockSpec((pl.Squeezed(), n_heads, tL, S),
                                    lambda b, l: (b, 0, l, 0))),
            compiler_params=cparams,
        )(q, k, v)
        if Lp != L:
            out = out[:, :L]
            attn = attn[:, :, :L]
        return out, attn

    out = pl.pallas_call(
        functools.partial(_mha_kernel_no_attn, **kern_kwargs),
        out_shape=o_shape,
        grid=(B, Lp // tL),
        in_specs=in_specs,
        out_specs=o_spec,
        compiler_params=cparams,
    )(q, k, v)
    if Lp != L:
        out = out[:, :L]
    return out, None


# ----------------------------- AttentionLayer -----------------------------

def init_attention_layer_params(key, d_model, n_heads, d_keys=None, d_values=None):
    d_keys = d_keys or d_model // n_heads
    d_values = d_values or d_model // n_heads
    ks = jax.random.split(key, 8)

    def lin(kw, kb, fan_in, fan_out):
        bound = 1.0 / math.sqrt(fan_in)
        # stored as (in, out): kernel computes x @ W + b (== PyTorch x @ W.T + b)
        w = jax.random.uniform(kw, (fan_in, fan_out), jnp.float32, -bound, bound)
        b = jax.random.uniform(kb, (fan_out,), jnp.float32, -bound, bound)
        return w, b

    return {
        "q": lin(ks[0], ks[1], d_model, d_keys * n_heads),
        "k": lin(ks[2], ks[3], d_model, d_keys * n_heads),
        "v": lin(ks[4], ks[5], d_model, d_values * n_heads),
        "o": lin(ks[6], ks[7], d_values * n_heads, d_model),
        "n_heads": n_heads,
        "d_keys": d_keys,
        "d_values": d_values,
    }


def prepare_attention_layer_params(params, compute_dtype=jnp.bfloat16):
    """One-time prep (hoisted out of the forward): fold the softmax scale into the Q
    projection, cast weights to the MXU compute dtype, and prebuild the fused QKV weight
    for the self-attention fast path."""
    H, dk, dv = params["n_heads"], params["d_keys"], params["d_values"]
    cdt = jnp.dtype(compute_dtype)
    scale = 1.0 / math.sqrt(dk)
    qw, qb = params["q"]
    kw, kb = params["k"]
    vw, vb = params["v"]
    ow, ob = params["o"]
    qw_s = qw * scale
    qb_s = qb * scale
    return {
        "n_heads": H, "d_keys": dk, "d_values": dv, "compute_dtype": cdt,
        "q": (qw_s.astype(cdt), qb_s.astype(jnp.float32)),
        "k": (kw.astype(cdt), kb.astype(jnp.float32)),
        "v": (vw.astype(cdt), vb.astype(jnp.float32)),
        "o": (ow.astype(cdt), ob.astype(jnp.float32)),
        "qkv_fused": (jnp.concatenate([qw_s, kw, vw], axis=1).astype(cdt),
                      jnp.concatenate([qb_s, kb, vb], axis=0).astype(jnp.float32)),
    }


def attention_layer_forward(prepared, queries, keys, values, attn_mask=None, *,
                            output_attention=False, attn_l_tile=128):
    """AttentionLayer forward.  Returns (out (B, L, d_model) f32, attn or None)."""
    # TODO(synk): attn_mask unused - matches FullAttention(mask_flag=False).
    del attn_mask
    H, dk, dv = prepared["n_heads"], prepared["d_keys"], prepared["d_values"]
    cdt = prepared["compute_dtype"]
    B, L, Dm = queries.shape
    _, S, _ = keys.shape

    if queries is keys and keys is values:
        # Self-attention: fused QKV projection (activations read from HBM once).
        # NOTE: gated on object identity; equal-but-distinct arrays take the 3-matmul path.
        w, bias = prepared["qkv_fused"]
        qkv = pallas_linear(queries.reshape(B * L, Dm).astype(cdt), w, bias, out_dtype=cdt)
        q = qkv[:, :H * dk]
        k = qkv[:, H * dk:2 * H * dk]
        v = qkv[:, 2 * H * dk:]
    else:
        qw, qb = prepared["q"]
        kw, kb = prepared["k"]
        vw, vb = prepared["v"]
        q = pallas_linear(queries.reshape(B * L, Dm).astype(cdt), qw, qb, out_dtype=cdt)
        k = pallas_linear(keys.reshape(B * S, Dm).astype(cdt), kw, kb, out_dtype=cdt)
        v = pallas_linear(values.reshape(B * S, Dm).astype(cdt), vw, vb, out_dtype=cdt)

    # Free reshapes (no transposes): heads stay packed along the lane dimension end-to-end.
    q = q.reshape(B, L, H * dk)
    k = k.reshape(B, S, H * dk)
    v = v.reshape(B, S, H * dv)

    out_h, attn = pallas_full_attention(
        q, k, v, n_heads=H, d_k=dk, d_v=dv,
        output_attention=output_attention, out_dtype=cdt,
        attn_dtype=cdt,  # bf16 attn writeback on the bf16 path halves HBM traffic
        approx_recip=(cdt != jnp.dtype(jnp.float32)),
        l_tile=attn_l_tile)

    ow, ob = prepared["o"]
    out = pallas_linear(out_h.reshape(B * L, H * dv), ow, ob,
                        out_dtype=jnp.float32).reshape(B, L, Dm)
    return out, attn


# ----------------------------- Reference (pure JAX, f32) -----------------------------

def reference_forward(params, queries, keys, values):
    B, L, Dm = queries.shape
    _, S, _ = keys.shape
    H = params["n_heads"]
    qw, qb = params["q"]
    kw, kb = params["k"]
    vw, vb = params["v"]
    ow, ob = params["o"]
    q = (queries @ qw + qb).reshape(B, L, H, -1)
    k = (keys @ kw + kb).reshape(B, S, H, -1)
    v = (values @ vw + vb).reshape(B, S, H, -1)
    E = q.shape[-1]
    scores = jnp.einsum("blhe,bshe->bhls", q, k) / math.sqrt(E)
    attn = jax.nn.softmax(scores, axis=-1)
    out = jnp.einsum("bhls,bshd->blhd", attn, v).reshape(B, L, -1)
    return out @ ow + ob, attn


if __name__ == "__main__":
    B, L, S, d_model, n_heads = 2, 8, 16, 32, 4

    key = jax.random.PRNGKey(0)
    kp, kq, kk, kv = jax.random.split(key, 4)
    params = init_attention_layer_params(kp, d_model, n_heads)

    queries = jax.random.normal(kq, (B, L, d_model), jnp.float32)
    keys = jax.random.normal(kk, (B, S, d_model), jnp.float32)
    values = jax.random.normal(kv, (B, S, d_model), jnp.float32)

    ref_out, ref_attn = reference_forward(params, queries, keys, values)

    # 1) f32 precision path with the attention matrix returned: checks the kernel logic.
    prep32 = prepare_attention_layer_params(params, jnp.float32)
    out32, attn32 = attention_layer_forward(prep32, queries, keys, values,
                                            output_attention=True)
    out32 = jax.block_until_ready(out32)
    attn32 = jax.block_until_ready(attn32)
    assert out32.shape == (B, L, d_model)
    assert attn32.shape == (B, n_heads, L, S)
    assert jnp.allclose(out32, ref_out, atol=1e-4, rtol=1e-4)
    assert jnp.allclose(attn32, ref_attn, atol=2e-5, rtol=2e-5)

    # 2) Default bf16-MXU path (f32 softmax + accumulation), bf16 attention writeback.
    prep16 = prepare_attention_layer_params(params, jnp.bfloat16)
    out16, attn16 = attention_layer_forward(prep16, queries, keys, values,
                                            output_attention=True)
    out16 = jax.block_until_ready(out16)
    assert attn16.dtype == jnp.bfloat16
    assert jnp.allclose(out16, ref_out, atol=5e-2, rtol=5e-2)
    assert jnp.allclose(attn16.astype(jnp.float32), ref_attn, atol=3e-2, rtol=3e-2)

    # 3) Perf default: no (B, H, L, S) attention-matrix writeback at all.
    out_na, attn_na = attention_layer_forward(prep16, queries, keys, values)
    out_na = jax.block_until_ready(out_na)
    assert attn_na is None
    assert jnp.allclose(out_na, ref_out, atol=5e-2, rtol=5e-2)

    # 4) Self-attention: exercises the fused-QKV projection fast path.
    out_sa, _ = attention_layer_forward(prep32, queries, queries, queries)
    out_sa = jax.block_until_ready(out_sa)
    ref_sa, _ = reference_forward(params, queries, queries, queries)
    assert jnp.allclose(out_sa, ref_sa, atol=1e-4, rtol=1e-4)

    # 5) Multi-L-tile + L-padding path (L=12 with an 8-row tile -> padded to 16 in-kernel).
    q12 = jax.random.normal(jax.random.PRNGKey(1), (B, 12, d_model), jnp.float32)
    ref12, ref12_attn = reference_forward(params, q12, keys, values)
    out12, attn12 = attention_layer_forward(prep32, q12, keys, values,
                                            output_attention=True, attn_l_tile=8)
    out12 = jax.block_until_ready(out12)
    assert out12.shape == (B, 12, d_model) and attn12.shape == (B, n_heads, 12, S)
    assert jnp.allclose(out12, ref12, atol=1e-4, rtol=1e-4)
    assert jnp.allclose(attn12, ref12_attn, atol=2e-5, rtol=2e-5)

    print("KERNEL_OK")
</pallas_src>

<mosaic_0001>
module attributes {stable_mosaic.version = 11 : i64} {
  func.func @_linear_kernel(%arg0: i32, %arg1: i32, %arg2: i32, %arg3: memref<16x32xf32, #tpu.memory_space<vmem>>, %arg4: memref<32x32xf32, #tpu.memory_space<vmem>>, %arg5: memref<1x32xf32, #tpu.memory_space<vmem>>, %arg6: memref<16x32xf32, #tpu.memory_space<vmem>>, %arg7: memref<16x32xf32, #tpu.memory_space<vmem>>) attributes {dimension_semantics = [#tpu.dimension_semantics<parallel>, #tpu.dimension_semantics<parallel>, #tpu.dimension_semantics<arbitrary>], iteration_bounds = array<i64: 1, 1, 1>, scalar_prefetch = 0 : i64, scratch_operands = 1 : i64, tpu.core_type = #tpu.core_type<tc>, window_params = [{transform_indices = @transform_0, window_bounds = array<i64: 16, 32>}, {transform_indices = @transform_1, window_bounds = array<i64: 32, 32>}, {transform_indices = @transform_2, window_bounds = array<i64: 1, 32>}, {transform_indices = @transform_3, window_bounds = array<i64: 16, 32>}]} {
    %c0_i32 = arith.constant 0 : i32
    %0 = arith.cmpi eq, %arg2, %c0_i32 : i32
    %1 = arith.extui %0 : i1 to i32
    %c0_i32_0 = arith.constant 0 : i32
    %2 = arith.cmpi ne, %1, %c0_i32_0 : i32
    scf.if %2 {
      %c0_10 = arith.constant 0 : index
      %c0_11 = arith.constant 0 : index
      %12 = vector.load %arg5[%c0_10, %c0_11] : memref<1x32xf32, #tpu.memory_space<vmem>>, vector<1x32xf32>
      %13 = vector.shape_cast %12 : vector<1x32xf32> to vector<1x32xf32>
      %14 = vector.broadcast %13 : vector<1x32xf32> to vector<16x32xf32>
      %c0_12 = arith.constant 0 : index
      %c0_13 = arith.constant 0 : index
      %15 = vector.load %arg7[%c0_12, %c0_13] : memref<16x32xf32, #tpu.memory_space<vmem>>, vector<16x32xf32>
      tpu.vector_store %arg7[%c0_12, %c0_13], %14 {strides = array<i32>} : memref<16x32xf32, #tpu.memory_space<vmem>>, vector<16x32xf32>,
    } else {
    }
    %c0 = arith.constant 0 : index
    %c0_1 = arith.constant 0 : index
    %3 = vector.load %arg7[%c0, %c0_1] : memref<16x32xf32, #tpu.memory_space<vmem>>, vector<16x32xf32>
    %c0_2 = arith.constant 0 : index
    %c0_3 = arith.constant 0 : index
    %4 = vector.load %arg3[%c0_2, %c0_3] : memref<16x32xf32, #tpu.memory_space<vmem>>, vector<16x32xf32>
    %c0_4 = arith.constant 0 : index
    %c0_5 = arith.constant 0 : index
    %5 = vector.load %arg4[%c0_4, %c0_5] : memref<32x32xf32, #tpu.memory_space<vmem>>, vector<32x32xf32>
    %cst = arith.constant dense<0.000000e+00> : vector<16x32xf32>
    %6 = tpu.matmul %4, %5, %cst {dimension_numbers = #tpu.dot_dimension_numbers<[1], [0], [0], [1], [0, 0, 1, 1], [], []>} : vector<16x32xf32>, vector<32x32xf32>, vector<16x32xf32> -> vector<16x32xf32>
    %7 = arith.addf %3, %6 : vector<16x32xf32>
    %c0_6 = arith.constant 0 : index
    %c0_7 = arith.constant 0 : index
    %8 = vector.load %arg7[%c0_6, %c0_7] : memref<16x32xf32, #tpu.memory_space<vmem>>, vector<16x32xf32>
    tpu.vector_store %arg7[%c0_6, %c0_7], %7 {strides = array<i32>} : memref<16x32xf32, #tpu.memory_space<vmem>>, vector<16x32xf32>,
    %c0_i32_8 = arith.constant 0 : i32
    %9 = arith.cmpi eq, %arg2, %c0_i32_8 : i32
    %10 = arith.extui %9 : i1 to i32
    %c0_i32_9 = arith.constant 0 : i32
    %11 = arith.cmpi ne, %10, %c0_i32_9 : i32
    scf.if %11 {
      %c0_10 = arith.constant 0 : index
      %c0_11 = arith.constant 0 : index
      %12 = vector.load %arg7[%c0_10, %c0_11] : memref<16x32xf32, #tpu.memory_space<vmem>>, vector<16x32xf32>
      %c0_12 = arith.constant 0 : index
      %c0_13 = arith.constant 0 : index
      %13 = vector.load %arg6[%c0_12, %c0_13] : memref<16x32xf32, #tpu.memory_space<vmem>>, vector<16x32xf32>
      tpu.vector_store %arg6[%c0_12, %c0_13], %12 {strides = array<i32>} : memref<16x32xf32, #tpu.memory_space<vmem>>, vector<16x32xf32>,
    } else {
    }
    return
  }
  func.func @transform_0(%arg0: i32, %arg1: i32, %arg2: i32) -> (i32, i32) {
    %c0_i32 = arith.constant 0 : i32
    return %arg0, %arg2 : i32, i32
  }
  func.func @transform_1(%arg0: i32, %arg1: i32, %arg2: i32) -> (i32, i32) {
    %c0_i32 = arith.constant 0 : i32
    return %arg2, %arg1 : i32, i32
  }
  func.func @transform_2(%arg0: i32, %arg1: i32, %arg2: i32) -> (i32, i32) {
    %c0_i32 = arith.constant 0 : i32
    %c0_i32_0 = arith.constant 0 : i32
    return %c0_i32, %arg1 : i32, i32
  }
  func.func @transform_3(%arg0: i32, %arg1: i32, %arg2: i32) -> (i32, i32) {
    %c0_i32 = arith.constant 0 : i32
    return %arg0, %arg1 : i32, i32
  }
}

</mosaic_0001>

<llo_original>
// kernel: tpu_custom_call.1
$region0: #{tpu_custom_call.1}
  #allocation0 [shape = 'u32[]', space=smem, size = 0x4, offset = 0x4, fixed_abs, tag = 'smem constant byte address 0x4 - core index']
  #allocation1 [shape = 'u32[144,128]{1,0:T(1,128)}', space=vmem, size = 0x12000, scoped, tag = 'internal scratch']
  #allocation2 [shape = 'f32[16,32]{1,0:T(8,128)}', space=vmem, size = 0x2000, scoped, tag = 'scratch operand']
  %s0 = inlined_call_operand.hbm [shape: f32[16,32], index: 0, kind: input, shape index: {}]
  %s1 = inlined_call_operand.hbm [shape: f32[32,32], index: 1, kind: input, shape index: {}]
  %s2 = inlined_call_operand.vmem [shape: f32[1,32], index: 2, kind: input, shape index: {}]
  %s3 = inlined_call_operand.hbm [shape: f32[16,32], index: 3, kind: output, shape index: {}]
  %s4 = sld [smem:[#allocation0]]
  $region38: #{tpu_custom_call.1} parent=0
    _
  %s6 = ssub.s32 1, %s4
  %s7 = scalar_select 0, %s6, %s4
  $region1: #{tpu_custom_call.1} parent=0
    #allocation3 [shape = 'u8[8192]{0}', space=vmem, size = 0x2000, scoped, tag = 'input window, operand 0, single buffered']
    #allocation4 [shape = 's32[1]{0}', space=sflag, size = 0x4, scoped, tag = 'scoped memory for tpu_custom_call.1']
    #allocation5 [shape = 's32[1]{0}', space=sflag, size = 0x4, scoped, tag = 'scoped memory for tpu_custom_call.1']
    #allocation6 [shape = 'u8[16384]{0}', space=vmem, size = 0x4000, scoped, tag = 'input window, operand 1, single buffered']
    #allocation7 [shape = 's32[1]{0}', space=sflag, size = 0x4, scoped, tag = 'scoped memory for tpu_custom_call.1']
    #allocation8 [shape = 'u8[8192]{0}', space=vmem, size = 0x2000, scoped, tag = 'output window, operand 0, single buffered']
    %8 = vsyncpa [#allocation4], 0
    %9 = vsyncpa [#allocation7], 0
    %10 = vsyncpa [#allocation5], 0
    // Predicated region
    $region2: #{tpu_custom_call.1} parent=1 // pred_check
      _
    $region3: #{tpu_custom_call.1} parent=1 // pred_check_branch
      %12 = sbr.rel (0) target = $region5
    $region4: #{tpu_custom_call.1} parent=1 // pred_region
      %s14 = ssub.s32 256, 256
      %15 = vsyncadd [#allocation4], %s14
      %s16 = sshll.u32 [#allocation3], 4
      %s17 = int_to_ptr.vmem [resolvable:$true] %s16
      %22 = dma.hbm_to_vmem [thread:$0]  %s0, 256, %s17, [#allocation4], 128, 128, 8
    $region5: #{tpu_custom_call.1} parent=1 // pred_fallthru
      _
    // Predicated region
    $region6: #{tpu_custom_call.1} parent=1 // pred_check
      _
    $region7: #{tpu_custom_call.1} parent=1 // pred_check_branch
      %24 = sbr.rel (0) target = $region9
    $region8: #{tpu_custom_call.1} parent=1 // pred_region
      %s26 = ssub.s32 512, 512
      %27 = vsyncadd [#allocation7], %s26
      %s28 = sshll.u32 [#allocation6], 4
      %s29 = int_to_ptr.vmem [resolvable:$true] %s28
      %34 = dma.hbm_to_vmem [thread:$0]  %s1, 512, %s29, [#allocation7], 128, 128, 8
    $region9: #{tpu_custom_call.1} parent=1 // pred_fallthru
      _
    // Predicated region
    $region10: #{tpu_custom_call.1} parent=1 // pred_check
      _
    $region11: #{tpu_custom_call.1} parent=1 // pred_check_branch
      %36 = sbr.rel (0) target = $region13
    $region12: #{tpu_custom_call.1} parent=1 // pred_region
      _
    $region13: #{tpu_custom_call.1} parent=1 // pred_fallthru
      _
    // Predicated region
    $region14: #{tpu_custom_call.1} parent=1 // pred_check
      _
    $region15: #{tpu_custom_call.1} parent=1 // pred_check_branch
      %38 = sbr.rel (0) target = $region17
    $region16: #{tpu_custom_call.1} parent=1 // pred_region
      %39 = dma.done [#allocation4], 256
    $region17: #{tpu_custom_call.1} parent=1 // pred_fallthru
      _
    // Predicated region
    $region18: #{tpu_custom_call.1} parent=1 // pred_check
      _
    $region19: #{tpu_custom_call.1} parent=1 // pred_check_branch
      %41 = sbr.rel (0) target = $region21
    $region20: #{tpu_custom_call.1} parent=1 // pred_region
      %42 = dma.done [#allocation7], 512
    $region21: #{tpu_custom_call.1} parent=1 // pred_fallthru
      _
    %p43 = scmp.eq.s32.totalorder 0, 0
    // Predicated region
    $region22: #{tpu_custom_call.1} parent=1 // pred_check
      %p44 = pneg %p43
    $region23: #{tpu_custom_call.1} parent=1 // pred_check_branch
      %46 = sbr.rel (%p44) target = $region25
    $region24: #{tpu_custom_call.1} parent=1 // pred_region
      %v47 = vld [vmem:[%s2] sm:$0x1]
      %v49 = vlaneseq
      %v50 = vshrl.u32 %v49, 7
      %v51 = vsub.s32 0, %v50
      %v52 = vrot.slane %v47, %v51
      %vm54 = vcmask 261120
      %55 = vst.msk [vmem:[#allocation2] sm:$0xff] %vm54, %v52
      %56 = vst.msk [vmem:[#allocation2 + $0x8] sm:$0xff] %vm54, %v52
    $region25: #{tpu_custom_call.1} parent=1 // pred_fallthru
      _
    %v57 = vld [vmem:[#allocation2] sm:$0xff]
    %v58 = vld [vmem:[#allocation2 + $0x8] sm:$0xff]
    %v59 = vld [vmem:[#allocation3] sm:$0xff]
    %v60 = vld [vmem:[#allocation3 + $0x8] sm:$0xff]
    %v61 = vld [vmem:[#allocation6] sm:$0xff]
    %v62 = vld [vmem:[#allocation6 + $0x8] sm:$0xff]
    %v63 = vld [vmem:[#allocation6 + $0x10] sm:$0xff]
    %v64 = vld [vmem:[#allocation6 + $0x18] sm:$0xff]
    %vm65 = vcmask 261120
    %v67 = vsel %vm65, %v59, 0
    %v70 = vsel %vm65, %v60, 0
    %72 = vmatprep.subr.mxu0 0.0
    %73 = vmatpush1.msra.mxu0 0.0
    %74 = vmatprep.subr.mxu0 0.0
    %75 = vmatpush1.msra.mxu0 0.0
    %76 = vmatprep.subr.mxu0 0.0
    %77 = vmatpush1.msra.mxu0 0.0
    %78 = vmatprep.subr.mxu0 0.0
    %79 = vmatpush1.msra.mxu0 0.0
    %80 = vmatprep.subr.mxu0 0.0
    %81 = vmatpush1.msra.mxu0 0.0
    %82 = vmatprep.subr.mxu0 0.0
    %83 = vmatpush1.msra.mxu0 0.0
    %84 = vmatprep.subr.mxu0 0.0
    %85 = vmatpush1.msra.mxu0 0.0
    %86 = vmatprep.subr.mxu0 0.0
    %87 = vmatpush1.msra.mxu0 0.0
    %88 = vmatprep.subr.mxu0 0.0
    %89 = vmatpush1.msra.mxu0 0.0
    %90 = vmatprep.subr.mxu0 0.0
    %91 = vmatpush1.msra.mxu0 0.0
    %92 = vmatprep.subr.mxu0 0.0
    %93 = vmatpush1.msra.mxu0 0.0
    %94 = vmatprep.subr.mxu0 0.0
    %95 = vmatpush1.msra.mxu0 0.0
    %96 = vmatprep.subr.mxu0 0.0
    %97 = vmatpush1.msra.mxu0 %v64
    %98 = vmatprep.subr.mxu0 0.0
    %99 = vmatpush1.msra.mxu0 %v63
    %100 = vmatprep.subr.mxu0 0.0
    %101 = vmatpush1.msra.mxu0 %v62
    %102 = vmatprep.subr.mxu0 0.0
    %103 = vmatpush1.msra.mxu0 %v61
    %104 = vmatprep.subr.mxu0 0.0
    %105 = vmatpush2.msra.mxu0 0.0
    %106 = vmatprep.subr.mxu0 0.0
    %107 = vmatpush2.msra.mxu0 0.0
    %108 = vmatprep.subr.mxu0 0.0
    %109 = vmatpush2.msra.mxu0 0.0
    %110 = vmatprep.subr.mxu0 0.0
    %111 = vmatpush2.msra.mxu0 0.0
    %112 = vmatprep.subr.mxu0 0.0
    %113 = vmatpush2.msra.mxu0 0.0
    %114 = vmatprep.subr.mxu0 0.0
    %115 = vmatpush2.msra.mxu0 0.0
    %116 = vmatprep.subr.mxu0 0.0
    %117 = vmatpush2.msra.mxu0 0.0
    %118 = vmatprep.subr.mxu0 0.0
    %119 = vmatpush2.msra.mxu0 0.0
    %120 = vmatprep.subr.mxu0 0.0
    %121 = vmatpush2.msra.mxu0 0.0
    %122 = vmatprep.subr.mxu0 0.0
    %123 = vmatpush2.msra.mxu0 0.0
    %124 = vmatprep.subr.mxu0 0.0
    %125 = vmatpush2.msra.mxu0 0.0
    %126 = vmatprep.subr.mxu0 0.0
    %127 = vmatpush2.msra.mxu0 0.0
    %128 = vmatprep.subr.mxu0 0.0
    %129 = vmatpush2.msra.mxu0 0.0
    %130 = vmatprep.subr.mxu0 0.0
    %131 = vmatpush2.msra.mxu0 0.0
    %132 = vmatprep.subr.mxu0 0.0
    %133 = vmatpush2.msra.mxu0 0.0
    %134 = vmatprep.subr.mxu0 0.0
    %135 = vmatpush2.msra.mxu0 0.0
    %136 = vmatprep.mubr.f32.mxu0 0.0
    %137 = vmatmul.mubr.f32.gmra.mxu0 %v67
    %v138 = vpop.f32.mrf.mxu0
    %v139 = vadd.f32 0.0, %v138
    %v140 = vpop.f32.mrf.mxu0
    %141 = vmatprep.mubr.f32.mxu0 0.0
    %142 = vmatmul.mubr.f32.gmra.mxu0 %v70
    %v143 = vpop.f32.mrf.mxu0
    %v144 = vadd.f32 0.0, %v143
    %v145 = vpop.f32.mrf.mxu0
    %146 = vdwg.mxu0
    %v147 = vadd.f32 %v57, %v139
    %v148 = vadd.f32 %v58, %v144
    %149 = vst.msk [vmem:[#allocation2] sm:$0xff] %vm65, %v147
    %150 = vst.msk [vmem:[#allocation2 + $0x8] sm:$0xff] %vm65, %v148
    // Predicated region
    $region26: #{tpu_custom_call.1} parent=1 // pred_check
      %p151 = pneg %p43
    $region27: #{tpu_custom_call.1} parent=1 // pred_check_branch
      %153 = sbr.rel (%p151) target = $region29
    $region28: #{tpu_custom_call.1} parent=1 // pred_region
      %v154 = vld [vmem:[#allocation2] sm:$0xff]
      %v155 = vld [vmem:[#allocation2 + $0x8] sm:$0xff]
      %156 = vst.msk [vmem:[#allocation8] sm:$0xff] %vm65, %v154
      %157 = vst.msk [vmem:[#allocation8 + $0x8] sm:$0xff] %vm65, %v155
    $region29: #{tpu_custom_call.1} parent=1 // pred_fallthru
      _
    // Predicated region
    $region30: #{tpu_custom_call.1} parent=1 // pred_check
      _
    $region31: #{tpu_custom_call.1} parent=1 // pred_check_branch
      %159 = sbr.rel (0) target = $region33
    $region32: #{tpu_custom_call.1} parent=1 // pred_region
      %s161 = ssub.s32 256, 256
      %162 = vsyncadd [#allocation5], %s161
      %s163 = sshll.u32 [#allocation8], 4
      %s164 = int_to_ptr.vmem [resolvable:$true] %s163
      %169 = dma.vmem_to_hbm [thread:$0]  %s164, 256, %s3, [#allocation5], 128, 128, 8
    $region33: #{tpu_custom_call.1} parent=1 // pred_fallthru
      _
    // Predicated region
    $region34: #{tpu_custom_call.1} parent=1 // pred_check
      _
    $region35: #{tpu_custom_call.1} parent=1 // pred_check_branch
      %171 = sbr.rel (0) target = $region37
    $region36: #{tpu_custom_call.1} parent=1 // pred_region
      %172 = dma.done [#allocation5], 256
    $region37: #{tpu_custom_call.1} parent=1 // pred_fallthru
      _
    %173 = vsyncpa [#allocation4], 1
    %174 = vsyncpa [#allocation7], 1
    %175 = vsyncpa [#allocation5], 1

</llo_original>
